<compile_context>
chip_gen: v5e
topology: v5e:2x2
jax: 0.10.0
libtpu: 0.0.40
codegen_flags: <defaults>
</compile_context>

<pallas_src>
import jax
import jax.numpy as jnp
from jax.experimental import pallas as pl
from jax.experimental.pallas import tpu as pltpu


def _round_up(a, b):
    return ((a + b - 1) // b) * b


def _chienn_message_kernel(xg_ref, wall_ref, ball_ref, wf_ref, bf_ref,
                           vmask_ref, out_ref):
    """One grid step processes `tile_n` whole circles (tile_nc flat rows).

    xg_ref    : (tile_nc, H)  bf16  gathered node features x[circle_index] (0 for padding)
    wall_ref  : (H, K*H)      bf16  fused neighbour-embedding weights (resident)
    ball_ref  : (1, K*H)      f32   fused neighbour-embedding biases  (resident)
    wf_ref    : (H, H)        bf16  final linear weight               (resident)
    bf_ref    : (1, H)        f32   final linear bias                 (resident)
    vmask_ref : (tile_nc, K)  f32   folded (num_neighbors > i) & (pos < num_neighbors)
    out_ref   : (tile_nc, H)  f32   message after mask, ELU and final linear
    """
    tile_nc, h = out_ref.shape
    k = vmask_ref.shape[1]

    # Fused K neighbour linears on the gathered rows: one bf16 MXU matmul with
    # f32 accumulation; bias added in f32.  (No per-step E recompute.)
    emb = jnp.dot(xg_ref[...], wall_ref[...],
                  preferred_element_type=jnp.float32) + ball_ref[...]

    vmask = vmask_ref[...]                                  # (tile_nc, K) f32

    # Chiral window sum: take window slice i, shift rows by +i with an XLU roll,
    # mask, accumulate.  Rows whose roll wraps across a node / tile boundary all
    # have pos >= max_num_neighbors and are zeroed by vmask (tile_nc is an exact
    # multiple of circle_size — asserted in the wrapper), so the roll is exact
    # everywhere it matters.  i = 0 initialises the accumulator (no zeros + add).
    acc = emb[:, :h] * vmask[:, 0:1]
    for i in range(1, k):                                   # k static -> unrolled
        g_i = pltpu.roll(emb[:, i * h:(i + 1) * h], shift=tile_nc - i, axis=0)
        acc = acc + g_i * vmask[:, i:i + 1]

    # Final embedding: ELU (exp on the EUP slot) then linear (`W_3 sigma`, eq. (4)).
    elu = jnp.where(acc > 0.0, acc, jnp.exp(acc) - 1.0)
    out_ref[...] = (jnp.dot(elu.astype(jnp.bfloat16), wf_ref[...],
                            preferred_element_type=jnp.float32) + bf_ref[...])


def chienn_message_forward(x, circle_index, params, *, tile_n=None):
    """JAX wrapper reproducing ChiENNMessage.forward semantics.

    Returns (msg, msg_mask):
      msg      : (num_nodes, max_num_neighbors, hidden_dim) float32
      msg_mask : (num_nodes, max_num_neighbors) bool
    """
    W, b, Wf, bf = params["W"], params["b"], params["Wf"], params["bf"]
    k, h, _ = W.shape
    wrap = k - 1
    n = x.shape[0]
    c = circle_index.shape[1]
    m = c - wrap                                            # max_num_neighbors

    # ----- bookkeeping (plain-JAX glue, cheap) -----
    padding_size = jnp.sum(circle_index == -1, axis=-1)
    num_neighbors = jnp.where(padding_size == c, 0,
                              c - padding_size - wrap).astype(jnp.int32)

    # Node-tile size: whole circles per step, multiple of 8 (sublane rule).
    # Default targets ~1024 flat rows per step (feeds the MXU and amortises the
    # ~0.35us per-grid-step overhead).
    if tile_n is None:
        tile_n = max(8, 1024 // c)
    tile_n = _round_up(max(8, tile_n), 8)
    tile_n = min(tile_n, _round_up(n, 8))
    n_pad = _round_up(n, tile_n)
    num_tiles = n_pad // tile_n
    tile_nc = tile_n * c
    nc = n * c
    nc_pad = n_pad * c
    # Roll-correctness invariant (every wrapped row is masked): the tile must
    # hold whole circles and the wrapping length must equal k - 1.
    assert tile_nc % c == 0 and wrap == k - 1

    # Index gather x[circle_index] — plain XLA embedding lookup in the wrapper.
    # Index 0 is a zero row so padding (-1) gathers zeros, exactly as the
    # PyTorch code's prepended zero row.  Cast to bf16 before gathering.
    flat_idx = circle_index.reshape(-1).astype(jnp.int32) + 1            # (nc,)
    x_zero = jnp.concatenate(
        [jnp.zeros((1, h), jnp.bfloat16), x.astype(jnp.bfloat16)], axis=0)
    xg = jnp.take(x_zero, flat_idx, axis=0)                              # (nc, h)
    xg = jnp.pad(xg, ((0, nc_pad - nc), (0, 0)))

    # Folded per-(row, window) validity mask:
    # vmask[r, i] = (num_neighbors[node(r)] > i) & (pos(r) < num_neighbors[node(r)])
    nn_rep = jnp.repeat(num_neighbors, c)                                # (nc,)
    pos_rep = jnp.tile(jnp.arange(c, dtype=jnp.int32), n)                # (nc,)
    win = jnp.arange(k, dtype=jnp.int32)
    vmask = ((nn_rep[:, None] > win[None, :])
             & (pos_rep[:, None] < nn_rep[:, None])).astype(jnp.float32)
    vmask = jnp.pad(vmask, ((0, nc_pad - nc), (0, 0)))

    # Fused neighbour-embedding parameters: emb = xg @ W_all + b_all.
    w_all = jnp.transpose(W, (1, 0, 2)).reshape(h, k * h).astype(jnp.bfloat16)
    b_all = b.reshape(1, k * h).astype(jnp.float32)

    cost = pl.CostEstimate(
        flops=int(2 * nc_pad * h * k * h            # fused neighbour linears
                  + 2 * nc_pad * h * h),            # final linear
        transcendentals=int(nc_pad * h),            # ELU exp
        bytes_accessed=int(2 * nc_pad * h           # xg in (bf16)
                           + 4 * nc_pad * k         # vmask in
                           + 4 * nc_pad * h         # out (f32)
                           + 2 * h * k * h + 4 * k * h + 2 * h * h + 4 * h))

    out_flat = pl.pallas_call(
        _chienn_message_kernel,
        out_shape=jax.ShapeDtypeStruct((nc_pad, h), jnp.float32),
        grid=(num_tiles,),
        in_specs=[
            pl.BlockSpec((tile_nc, h), lambda t: (t, 0)),    # gathered features
            pl.BlockSpec((h, k * h), lambda t: (0, 0)),      # W_all   (resident)
            pl.BlockSpec((1, k * h), lambda t: (0, 0)),      # b_all   (resident)
            pl.BlockSpec((h, h), lambda t: (0, 0)),          # Wf      (resident)
            pl.BlockSpec((1, h), lambda t: (0, 0)),          # bf      (resident)
            pl.BlockSpec((tile_nc, k), lambda t: (t, 0)),    # folded masks
        ],
        out_specs=pl.BlockSpec((tile_nc, h), lambda t: (t, 0)),
        compiler_params=pltpu.CompilerParams(
            dimension_semantics=("parallel",)),
        cost_estimate=cost,
    )(
        xg,
        w_all,
        b_all,
        Wf.astype(jnp.bfloat16),
        bf.reshape(1, h).astype(jnp.float32),
        vmask,
    )

    msg = out_flat[:nc].reshape(n, c, h)[:, :m, :]
    msg_mask = (jnp.arange(1, c + 1, dtype=jnp.int32)[None, :]
                <= num_neighbors[:, None])[:, :m]
    return msg, msg_mask


def reference_forward(x, circle_index, W, b, Wf, bf):
    """Pure-JAX transliteration of the PyTorch forward (for checking)."""
    hp = jax.lax.Precision.HIGHEST
    n, h = x.shape
    _, c = circle_index.shape
    k = W.shape[0]
    wrap = k - 1
    embs = [jnp.dot(x, W[i], precision=hp) + b[i] for i in range(k)]
    zeros = jnp.zeros((1, h), x.dtype)
    embs = [jnp.concatenate([zeros, e], axis=0) for e in embs]
    padding_size = jnp.sum(circle_index == -1, axis=-1)
    num_neighbors = c - padding_size - wrap
    num_neighbors = jnp.where(padding_size == c, 0, num_neighbors)
    flat = circle_index.reshape(-1) + 1
    nc = flat.shape[0]
    padded = jnp.concatenate([flat, jnp.zeros((wrap,), flat.dtype)])
    shifted_list = []
    for i in range(k):
        si = padded[i:i + nc]
        se = embs[i][si]
        mask = jnp.repeat(num_neighbors <= i, c).reshape(-1, 1)
        se = jnp.where(mask, 0.0, se)
        shifted_list.append(se)
    msg = jnp.sum(jnp.stack(shifted_list, axis=-2), axis=-2).reshape(n, c, h)
    msg_mask = jnp.arange(1, c + 1)[None, :] <= num_neighbors[:, None]
    msg = msg[:, :-wrap, :]
    msg_mask = msg_mask[:, :-wrap]
    msg = jnp.where(msg_mask[..., None], msg, 0.0)
    msg = jnp.where(msg > 0.0, msg, jnp.exp(msg) - 1.0)          # ELU
    msg = jnp.dot(msg, Wf, precision=hp) + bf
    return msg, msg_mask


if __name__ == "__main__":
    N, H, K, MAX_NB = 16, 32, 3, 6          # num_nodes, hidden_dim, k, max_num_neighbors
    C = MAX_NB + K - 1                      # circle_size

    key = jax.random.PRNGKey(0)
    kx, knb, kw, kb, kwf, kbf = jax.random.split(key, 6)

    # Deterministic parameters (ChiENNMessage.__init__: k Linear(H,H) + ELU+Linear(H,H))
    x = jax.random.normal(kx, (N, H), jnp.float32)
    W = jax.random.normal(kw, (K, H, H), jnp.float32) / jnp.sqrt(H)
    b = 0.1 * jax.random.normal(kb, (K, H), jnp.float32)
    Wf = jax.random.normal(kwf, (H, H), jnp.float32) / jnp.sqrt(H)
    bf = 0.1 * jax.random.normal(kbf, (H,), jnp.float32)

    # Synthetic circle_index: per-node neighbor list, first (k-1) repeated, padded with -1
    counts = [(3 * i) % (MAX_NB + 1) for i in range(N)]     # covers 0 .. MAX_NB
    nbr = jax.device_get(jax.random.randint(knb, (N, MAX_NB), 0, N))
    rows = []
    for nidx in range(N):
        mcnt = counts[nidx]
        nbrs = [int(nbr[nidx, j]) for j in range(mcnt)]
        circ = (nbrs + (nbrs * K)[:K - 1]) if mcnt > 0 else []
        circ = circ + [-1] * (C - len(circ))
        rows.append(circ)
    circle_index = jnp.array(rows, dtype=jnp.int32)

    params = {"W": W, "b": b, "Wf": Wf, "bf": bf}
    # tile_n=8 -> 2 grid steps, exercises the tiled/pipelined path.
    msg, msg_mask = chienn_message_forward(x, circle_index, params, tile_n=8)
    msg = jax.block_until_ready(msg)
    msg_mask = jax.block_until_ready(msg_mask)

    # Sanity check against a pure-JAX transliteration of the PyTorch code.
    msg_ref, mask_ref = reference_forward(x, circle_index, W, b, Wf, bf)
    assert msg.shape == (N, MAX_NB, H) and msg_mask.shape == (N, MAX_NB)
    assert bool(jnp.all(msg_mask == mask_ref))
    # Tolerance sized for bf16 MXU operands with f32 accumulation.
    err = float(jnp.max(jnp.abs(msg - msg_ref)))
    assert err < 1e-1, f"max abs err {err}"

    print("KERNEL_OK")
</pallas_src>

<mosaic_0001>
module attributes {stable_mosaic.version = 11 : i64} {
  func.func @_chienn_message_kernel(%arg0: i32, %arg1: memref<64x32xbf16, #tpu.memory_space<vmem>>, %arg2: memref<32x96xbf16, #tpu.memory_space<vmem>>, %arg3: memref<1x96xf32, #tpu.memory_space<vmem>>, %arg4: memref<32x32xbf16, #tpu.memory_space<vmem>>, %arg5: memref<1x32xf32, #tpu.memory_space<vmem>>, %arg6: memref<64x3xf32, #tpu.memory_space<vmem>>, %arg7: memref<64x32xf32, #tpu.memory_space<vmem>>) attributes {dimension_semantics = [#tpu.dimension_semantics<parallel>], iteration_bounds = array<i64: 2>, scalar_prefetch = 0 : i64, scratch_operands = 0 : i64, tpu.core_type = #tpu.core_type<tc>, window_params = [{transform_indices = @transform_0, window_bounds = array<i64: 64, 32>}, {pipeline_mode = #tpu.pipeline_mode<synchronous>, transform_indices = @transform_1, window_bounds = array<i64: 32, 96>}, {pipeline_mode = #tpu.pipeline_mode<synchronous>, transform_indices = @transform_2, window_bounds = array<i64: 1, 96>}, {pipeline_mode = #tpu.pipeline_mode<synchronous>, transform_indices = @transform_3, window_bounds = array<i64: 32, 32>}, {pipeline_mode = #tpu.pipeline_mode<synchronous>, transform_indices = @transform_4, window_bounds = array<i64: 1, 32>}, {transform_indices = @transform_5, window_bounds = array<i64: 64, 3>}, {transform_indices = @transform_6, window_bounds = array<i64: 64, 32>}]} {
    %c0 = arith.constant 0 : index
    %c0_0 = arith.constant 0 : index
    %0 = vector.load %arg1[%c0, %c0_0] : memref<64x32xbf16, #tpu.memory_space<vmem>>, vector<64x32xbf16>
    %c0_1 = arith.constant 0 : index
    %c0_2 = arith.constant 0 : index
    %1 = vector.load %arg2[%c0_1, %c0_2] : memref<32x96xbf16, #tpu.memory_space<vmem>>, vector<32x96xbf16>
    %cst = arith.constant dense<0.000000e+00> : vector<64x96xf32>
    %2 = tpu.matmul %0, %1, %cst {dimension_numbers = #tpu.dot_dimension_numbers<[1], [0], [0], [1], [0, 0, 1, 1], [], []>} : vector<64x32xbf16>, vector<32x96xbf16>, vector<64x96xf32> -> vector<64x96xf32>
    %c0_3 = arith.constant 0 : index
    %c0_4 = arith.constant 0 : index
    %3 = vector.load %arg3[%c0_3, %c0_4] : memref<1x96xf32, #tpu.memory_space<vmem>>, vector<1x96xf32>
    %4 = vector.broadcast %3 : vector<1x96xf32> to vector<64x96xf32>
    %5 = arith.addf %2, %4 : vector<64x96xf32>
    %c0_5 = arith.constant 0 : index
    %c0_6 = arith.constant 0 : index
    %6 = vector.load %arg6[%c0_5, %c0_6] : memref<64x3xf32, #tpu.memory_space<vmem>>, vector<64x3xf32>
    %7 = vector.extract_strided_slice %5 {offsets = [0, 0], sizes = [64, 32], strides = [1, 1]} : vector<64x96xf32> to vector<64x32xf32>
    %8 = vector.extract_strided_slice %6 {offsets = [0, 0], sizes = [64, 1], strides = [1, 1]} : vector<64x3xf32> to vector<64x1xf32>
    %9 = vector.broadcast %8 : vector<64x1xf32> to vector<64x32xf32>
    %10 = arith.mulf %7, %9 : vector<64x32xf32>
    %11 = vector.extract_strided_slice %5 {offsets = [0, 32], sizes = [64, 32], strides = [1, 1]} : vector<64x96xf32> to vector<64x32xf32>
    %c63_i32 = arith.constant 63 : i32
    %12 = tpu.dynamic_rotate %11 by %c63_i32 dim 0 : vector<64x32xf32>, i32 -> vector<64x32xf32>
    %13 = vector.extract_strided_slice %6 {offsets = [0, 1], sizes = [64, 1], strides = [1, 1]} : vector<64x3xf32> to vector<64x1xf32>
    %14 = vector.broadcast %13 : vector<64x1xf32> to vector<64x32xf32>
    %15 = arith.mulf %12, %14 : vector<64x32xf32>
    %16 = arith.addf %10, %15 : vector<64x32xf32>
    %17 = vector.extract_strided_slice %5 {offsets = [0, 64], sizes = [64, 32], strides = [1, 1]} : vector<64x96xf32> to vector<64x32xf32>
    %c62_i32 = arith.constant 62 : i32
    %18 = tpu.dynamic_rotate %17 by %c62_i32 dim 0 : vector<64x32xf32>, i32 -> vector<64x32xf32>
    %19 = vector.extract_strided_slice %6 {offsets = [0, 2], sizes = [64, 1], strides = [1, 1]} : vector<64x3xf32> to vector<64x1xf32>
    %20 = vector.broadcast %19 : vector<64x1xf32> to vector<64x32xf32>
    %21 = arith.mulf %18, %20 : vector<64x32xf32>
    %22 = arith.addf %16, %21 : vector<64x32xf32>
    %cst_7 = arith.constant 0.000000e+00 : f32
    %23 = vector.broadcast %cst_7 : f32 to vector<64x32xf32>
    %24 = arith.cmpf ogt, %22, %23 : vector<64x32xf32>
    %25 = math.exp %22 : vector<64x32xf32>
    %cst_8 = arith.constant 1.000000e+00 : f32
    %26 = vector.broadcast %cst_8 : f32 to vector<64x32xf32>
    %27 = arith.subf %25, %26 : vector<64x32xf32>
    %28 = arith.select %24, %22, %27 : vector<64x32xi1>, vector<64x32xf32>
    %29 = arith.truncf %28 : vector<64x32xf32> to vector<64x32xbf16>
    %c0_9 = arith.constant 0 : index
    %c0_10 = arith.constant 0 : index
    %30 = vector.load %arg4[%c0_9, %c0_10] : memref<32x32xbf16, #tpu.memory_space<vmem>>, vector<32x32xbf16>
    %cst_11 = arith.constant dense<0.000000e+00> : vector<64x32xf32>
    %31 = tpu.matmul %29, %30, %cst_11 {dimension_numbers = #tpu.dot_dimension_numbers<[1], [0], [0], [1], [0, 0, 1, 1], [], []>} : vector<64x32xbf16>, vector<32x32xbf16>, vector<64x32xf32> -> vector<64x32xf32>
    %c0_12 = arith.constant 0 : index
    %c0_13 = arith.constant 0 : index
    %32 = vector.load %arg5[%c0_12, %c0_13] : memref<1x32xf32, #tpu.memory_space<vmem>>, vector<1x32xf32>
    %33 = vector.broadcast %32 : vector<1x32xf32> to vector<64x32xf32>
    %34 = arith.addf %31, %33 : vector<64x32xf32>
    %c0_14 = arith.constant 0 : index
    %c0_15 = arith.constant 0 : index
    %35 = vector.load %arg7[%c0_14, %c0_15] : memref<64x32xf32, #tpu.memory_space<vmem>>, vector<64x32xf32>
    tpu.vector_store %arg7[%c0_14, %c0_15], %34 {strides = array<i32>} : memref<64x32xf32, #tpu.memory_space<vmem>>, vector<64x32xf32>,
    return
  }
  func.func @transform_0(%arg0: i32) -> (i32, i32) {
    %c0_i32 = arith.constant 0 : i32
    %c0_i32_0 = arith.constant 0 : i32
    return %arg0, %c0_i32 : i32, i32
  }
  func.func @transform_1(%arg0: i32) -> (i32, i32) {
    %c0_i32 = arith.constant 0 : i32
    %c0_i32_0 = arith.constant 0 : i32
    %c0_i32_1 = arith.constant 0 : i32
    return %c0_i32, %c0_i32_0 : i32, i32
  }
  func.func @transform_2(%arg0: i32) -> (i32, i32) {
    %c0_i32 = arith.constant 0 : i32
    %c0_i32_0 = arith.constant 0 : i32
    %c0_i32_1 = arith.constant 0 : i32
    return %c0_i32, %c0_i32_0 : i32, i32
  }
  func.func @transform_3(%arg0: i32) -> (i32, i32) {
    %c0_i32 = arith.constant 0 : i32
    %c0_i32_0 = arith.constant 0 : i32
    %c0_i32_1 = arith.constant 0 : i32
    return %c0_i32, %c0_i32_0 : i32, i32
  }
  func.func @transform_4(%arg0: i32) -> (i32, i32) {
    %c0_i32 = arith.constant 0 : i32
    %c0_i32_0 = arith.constant 0 : i32
    %c0_i32_1 = arith.constant 0 : i32
    return %c0_i32, %c0_i32_0 : i32, i32
  }
  func.func @transform_5(%arg0: i32) -> (i32, i32) {
    %c0_i32 = arith.constant 0 : i32
    %c0_i32_0 = arith.constant 0 : i32
    return %arg0, %c0_i32 : i32, i32
  }
  func.func @transform_6(%arg0: i32) -> (i32, i32) {
    %c0_i32 = arith.constant 0 : i32
    %c0_i32_0 = arith.constant 0 : i32
    return %arg0, %c0_i32 : i32, i32
  }
}

</mosaic_0001>

<llo_original>
// kernel: tpu_custom_call.1
$region0: #{tpu_custom_call.1}
  #allocation0 [shape = 'u32[]', space=smem, size = 0x4, offset = 0x4, fixed_abs, tag = 'smem constant byte address 0x4 - core index']
  #allocation1 [shape = 'u32[72,128]{1,0:T(1,128)}', space=vmem, size = 0x9000, scoped, tag = 'internal scratch']
  %s0 = inlined_call_operand.vmem [shape: bf16[128,32], index: 0, kind: input, shape index: {}]
  %s1 = inlined_call_operand.vmem [shape: bf16[32,96], index: 1, kind: input, shape index: {}]
  %s2 = inlined_call_operand.vmem [shape: f32[1,96], index: 2, kind: input, shape index: {}]
  %s3 = inlined_call_operand.vmem [shape: bf16[32,32], index: 3, kind: input, shape index: {}]
  %s4 = inlined_call_operand.vmem [shape: f32[1,32], index: 4, kind: input, shape index: {}]
  %s5 = inlined_call_operand.vmem [shape: f32[128,3], index: 5, kind: input, shape index: {}]
  %s6 = inlined_call_operand.vmem [shape: f32[128,32], index: 6, kind: output, shape index: {}]
  %s7 = sld [smem:[#allocation0]]
  $region57: #{tpu_custom_call.1} parent=0
    _
  %s9 = ssub.s32 1, %s7
  %s10 = scalar_select 0, %s9, %s7
  loop: start=0, step=1, limit=4
  $region2: #{tpu_custom_call.1} parent=0 // loop_pre_header
    _
  $region3: #{tpu_custom_call.1} parent=0 // loop_header
    %s12 = sphi 0, %s16
    %p13 = scmp.ge.s32.totalorder %s12, 4
    %s22 = sphi 0, %s24
    %s25 = sphi 0, %s22
    %s26 = sphi 0, %s25
    %s42 = sphi 0, %s26
    %s46 = sphi 0, %s46
    %s48 = sphi 0, %s46
    %s49 = sphi 0, %s48
    %s63 = sphi 0, %s49
    %s67 = sphi 0, %s67
    %s69 = sphi 0, %s67
    %s70 = sphi 0, %s69
    %s84 = sphi 0, %s70
    %s88 = sphi 0, %s88
    %s90 = sphi 0, %s88
    %s91 = sphi 0, %s90
    %s105 = sphi 0, %s91
    %s109 = sphi 0, %s109
    %s111 = sphi 0, %s109
    %s112 = sphi 0, %s111
    %s126 = sphi 0, %s112
    %s132 = sphi 0, %s134
    %s135 = sphi 0, %s132
    %s136 = sphi 0, %s135
    %s152 = sphi 0, %s136
    %s158 = sphi 0, %s160
    %s161 = sphi 0, %s158
    %s162 = sphi 0, %s161
    %s178 = sphi 0, %s162
  $region4: #{tpu_custom_call.1} parent=0 // loop_header_branch
    %15 = sbr.rel (%p13) target = $region8
  $region5: #{tpu_custom_call.1} parent=0 // loop_body
    %s17 = ssub.s32 %s12, 1
    %s18 = ssub.s32 %s12, 2
    %s19 = sadd.s32 %s12, 1
    %s20 = ssub.s32 %s12, %s19
    %p21 = scmp.eq.s32.totalorder %s20, 0
    %s23 = sadd.s32 %s22, 1
    %s24 = scalar_select %p21, %s22, %s23
    %p27 = pneg %p21
    %p28 = scmp.eq.s32.totalorder %s12, 1
    %p29 = por %p27, %p28
    %p30 = scmp.ne.s32.totalorder %s22, %s25
    %p31 = scmp.eq.s32.totalorder %s12, 0
    %p32 = por %p30, %p31
    %p33 = scmp.ne.s32.totalorder %s22, %s25
    %p34 = scmp.eq.s32.totalorder %s17, 1
    %p35 = por %p33, %p34
    %p36 = scmp.ne.s32.totalorder %s25, %s26
    %p37 = scmp.eq.s32.totalorder %s17, 0
    %p38 = por %p36, %p37
    %p39 = scmp.ne.s32.totalorder %s25, %s26
    %p40 = scmp.eq.s32.totalorder %s18, 1
    %p41 = por %p39, %p40
    %p43 = scmp.ne.s32.totalorder %s26, %s42
    %p44 = scmp.eq.s32.totalorder %s18, 0
    %p45 = por %p43, %p44
    %s47 = sadd.s32 %s46, 1
    %p50 = scmp.eq.s32.totalorder %s12, 1
    %p51 = scmp.ne.s32.totalorder %s46, %s48
    %p52 = scmp.eq.s32.totalorder %s12, 0
    %p53 = por %p51, %p52
    %p54 = scmp.ne.s32.totalorder %s46, %s48
    %p55 = scmp.eq.s32.totalorder %s17, 1
    %p56 = por %p54, %p55
    %p57 = scmp.ne.s32.totalorder %s48, %s49
    %p58 = scmp.eq.s32.totalorder %s17, 0
    %p59 = por %p57, %p58
    %p60 = scmp.ne.s32.totalorder %s48, %s49
    %p61 = scmp.eq.s32.totalorder %s18, 1
    %p62 = por %p60, %p61
    %p64 = scmp.ne.s32.totalorder %s49, %s63
    %p65 = scmp.eq.s32.totalorder %s18, 0
    %p66 = por %p64, %p65
    %s68 = sadd.s32 %s67, 1
    %p71 = scmp.eq.s32.totalorder %s12, 1
    %p72 = scmp.ne.s32.totalorder %s67, %s69
    %p73 = scmp.eq.s32.totalorder %s12, 0
    %p74 = por %p72, %p73
    %p75 = scmp.ne.s32.totalorder %s67, %s69
    %p76 = scmp.eq.s32.totalorder %s17, 1
    %p77 = por %p75, %p76
    %p78 = scmp.ne.s32.totalorder %s69, %s70
    %p79 = scmp.eq.s32.totalorder %s17, 0
    %p80 = por %p78, %p79
    %p81 = scmp.ne.s32.totalorder %s69, %s70
    %p82 = scmp.eq.s32.totalorder %s18, 1
    %p83 = por %p81, %p82
    %p85 = scmp.ne.s32.totalorder %s70, %s84
    %p86 = scmp.eq.s32.totalorder %s18, 0
    %p87 = por %p85, %p86
    %s89 = sadd.s32 %s88, 1
    %p92 = scmp.eq.s32.totalorder %s12, 1
    %p93 = scmp.ne.s32.totalorder %s88, %s90
    %p94 = scmp.eq.s32.totalorder %s12, 0
    %p95 = por %p93, %p94
    %p96 = scmp.ne.s32.totalorder %s88, %s90
    %p97 = scmp.eq.s32.totalorder %s17, 1
    %p98 = por %p96, %p97
    %p99 = scmp.ne.s32.totalorder %s90, %s91
    %p100 = scmp.eq.s32.totalorder %s17, 0
    %p101 = por %p99, %p100
    %p102 = scmp.ne.s32.totalorder %s90, %s91
    %p103 = scmp.eq.s32.totalorder %s18, 1
    %p104 = por %p102, %p103
    %p106 = scmp.ne.s32.totalorder %s91, %s105
    %p107 = scmp.eq.s32.totalorder %s18, 0
    %p108 = por %p106, %p107
    %s110 = sadd.s32 %s109, 1
    %p113 = scmp.eq.s32.totalorder %s12, 1
    %p114 = scmp.ne.s32.totalorder %s109, %s111
    %p115 = scmp.eq.s32.totalorder %s12, 0
    %p116 = por %p114, %p115
    %p117 = scmp.ne.s32.totalorder %s109, %s111
    %p118 = scmp.eq.s32.totalorder %s17, 1
    %p119 = por %p117, %p118
    %p120 = scmp.ne.s32.totalorder %s111, %s112
    %p121 = scmp.eq.s32.totalorder %s17, 0
    %p122 = por %p120, %p121
    %p123 = scmp.ne.s32.totalorder %s111, %s112
    %p124 = scmp.eq.s32.totalorder %s18, 1
    %p125 = por %p123, %p124
    %p127 = scmp.ne.s32.totalorder %s112, %s126
    %p128 = scmp.eq.s32.totalorder %s18, 0
    %p129 = por %p127, %p128
    %s130 = ssub.s32 %s12, %s19
    %p131 = scmp.eq.s32.totalorder %s130, 0
    %s133 = sadd.s32 %s132, 1
    %s134 = scalar_select %p131, %s132, %s133
    %p137 = pneg %p131
    %p138 = scmp.eq.s32.totalorder %s12, 1
    %p139 = por %p137, %p138
    %p140 = scmp.ne.s32.totalorder %s132, %s135
    %p141 = scmp.eq.s32.totalorder %s12, 0
    %p142 = por %p140, %p141
    %p143 = scmp.ne.s32.totalorder %s132, %s135
    %p144 = scmp.eq.s32.totalorder %s17, 1
    %p145 = por %p143, %p144
    %p146 = scmp.ne.s32.totalorder %s135, %s136
    %p147 = scmp.eq.s32.totalorder %s17, 0
    %p148 = por %p146, %p147
    %p149 = scmp.ne.s32.totalorder %s135, %s136
    %p150 = scmp.eq.s32.totalorder %s18, 1
    %p151 = por %p149, %p150
    %p153 = scmp.ne.s32.totalorder %s136, %s152
    %p154 = scmp.eq.s32.totalorder %s18, 0
    %p155 = por %p153, %p154
    %s156 = ssub.s32 %s12, %s19
    %p157 = scmp.eq.s32.totalorder %s156, 0
    %s159 = sadd.s32 %s158, 1
    %s160 = scalar_select %p157, %s158, %s159
    %p163 = pneg %p157
    %p164 = scmp.eq.s32.totalorder %s12, 1
    %p165 = por %p163, %p164
    %p166 = scmp.ne.s32.totalorder %s158, %s161
    %p167 = scmp.eq.s32.totalorder %s12, 0
    %p168 = por %p166, %p167
    %p169 = scmp.ne.s32.totalorder %s158, %s161
    %p170 = scmp.eq.s32.totalorder %s17, 1
    %p171 = por %p169, %p170
    %p172 = scmp.ne.s32.totalorder %s161, %s162
    %p173 = scmp.eq.s32.totalorder %s17, 0
    %p174 = por %p172, %p173
    %p175 = scmp.ne.s32.totalorder %s161, %s162
    %p176 = scmp.eq.s32.totalorder %s18, 1
    %p177 = por %p175, %p176
    %p179 = scmp.ne.s32.totalorder %s162, %s178
    %p180 = scmp.eq.s32.totalorder %s18, 0
    %p181 = por %p179, %p180
    %p182 = scmp.le.s32.totalorder 1, %s12
    %p183 = scmp.lt.s32.totalorder %s12, 3
    %p184 = pnand %p182, %p183
    %p185 = pneg %p184
    // Predicated region
    $region9: #{tpu_custom_call.1} parent=5 // pred_check
      _
    $region10: #{tpu_custom_call.1} parent=5 // pred_check_branch
      %187 = sbr.rel (%p184) target = $region12
    $region11: #{tpu_custom_call.1} parent=5 // pred_region
      %s188 = ssub.s32 %s12, 1
      // Predicated region
      $region13: #{tpu_custom_call.1} parent=11 // pred_check
        %p189 = pneg %p59
      $region14: #{tpu_custom_call.1} parent=11 // pred_check_branch
        %191 = sbr.rel (%p189) target = $region16
      $region15: #{tpu_custom_call.1} parent=11 // pred_region
        _
      $region16: #{tpu_custom_call.1} parent=11 // pred_fallthru
        _
      // Predicated region
      $region17: #{tpu_custom_call.1} parent=11 // pred_check
        %p192 = pneg %p80
      $region18: #{tpu_custom_call.1} parent=11 // pred_check_branch
        %194 = sbr.rel (%p192) target = $region20
      $region19: #{tpu_custom_call.1} parent=11 // pred_region
        _
      $region20: #{tpu_custom_call.1} parent=11 // pred_fallthru
        _
      // Predicated region
      $region21: #{tpu_custom_call.1} parent=11 // pred_check
        %p195 = pneg %p101
      $region22: #{tpu_custom_call.1} parent=11 // pred_check_branch
        %197 = sbr.rel (%p195) target = $region24
      $region23: #{tpu_custom_call.1} parent=11 // pred_region
        _
      $region24: #{tpu_custom_call.1} parent=11 // pred_fallthru
        _
      // Predicated region
      $region25: #{tpu_custom_call.1} parent=11 // pred_check
        %p198 = pneg %p122
      $region26: #{tpu_custom_call.1} parent=11 // pred_check_branch
        %200 = sbr.rel (%p198) target = $region28
      $region27: #{tpu_custom_call.1} parent=11 // pred_region
        _
      $region28: #{tpu_custom_call.1} parent=11 // pred_fallthru
        _
    $region12: #{tpu_custom_call.1} parent=5 // pred_fallthru
      _
    %p201 = scmp.lt.s32.totalorder %s12, 2
    // Predicated region
    $region29: #{tpu_custom_call.1} parent=5 // pred_check
      %p202 = pneg %p201
    $region30: #{tpu_custom_call.1} parent=5 // pred_check_branch
      %204 = sbr.rel (%p202) target = $region32
    $region31: #{tpu_custom_call.1} parent=5 // pred_region
      // Predicated region
      $region33: #{tpu_custom_call.1} parent=31 // pred_check
        %p205 = pneg %p32
      $region34: #{tpu_custom_call.1} parent=31 // pred_check_branch
        %207 = sbr.rel (%p205) target = $region36
      $region35: #{tpu_custom_call.1} parent=31 // pred_region
        %s208 = smul.u32 8, %s12
        %p209 = scmp.lt.s32.totalorder %s208, 15
        %s210 = scalar_select %p209, %s208, 15
        %s211 = smul.addr %s210, 4
        %s212 = scalar_lea.vmem %s0, %s211
        %s213 = smul.u32 8, %s12
      $region36: #{tpu_custom_call.1} parent=31 // pred_fallthru
        _
      // Predicated region
      $region37: #{tpu_custom_call.1} parent=31 // pred_check
        %p214 = pneg %p142
      $region38: #{tpu_custom_call.1} parent=31 // pred_check_branch
        %216 = sbr.rel (%p214) target = $region40
      $region39: #{tpu_custom_call.1} parent=31 // pred_region
        %s217 = smul.u32 8, %s12
        %p218 = scmp.lt.s32.totalorder %s217, 15
        %s219 = scalar_select %p218, %s217, 15
        %s220 = smul.addr %s219, 8
        %s221 = scalar_lea.vmem %s5, %s220
        %s222 = smul.u32 8, %s12
      $region40: #{tpu_custom_call.1} parent=31 // pred_fallthru
        _
    $region32: #{tpu_custom_call.1} parent=5 // pred_fallthru
      _
    %p223 = scmp.le.s32.totalorder 1, %s12
    %p224 = scmp.lt.s32.totalorder %s12, 3
    %p225 = pnand %p223, %p224
    %p226 = pneg %p225
    // Predicated region
    $region41: #{tpu_custom_call.1} parent=5 // pred_check
      _
    $region42: #{tpu_custom_call.1} parent=5 // pred_check_branch
      %228 = sbr.rel (%p225) target = $region44
    $region43: #{tpu_custom_call.1} parent=5 // pred_region
      %s229 = ssub.s32 %s12, 1
      %s230 = smul.u32 8, %s17
      %p231 = scmp.lt.s32.totalorder %s230, 15
      %s232 = scalar_select %p231, %s230, 15
      %s233 = smul.addr %s232, 4
      %s234 = scalar_lea.vmem %s0, %s233
      %p235 = pneg %p38
      %p236 = pneg %p35
      %p237 = pneg %p59
      %p238 = pneg %p56
      %p239 = pneg %p80
      %p240 = pneg %p77
      %p241 = pneg %p101
      %p242 = pneg %p98
      %p243 = pneg %p122
      %p244 = pneg %p119
      %s245 = smul.u32 8, %s17
      %p246 = scmp.lt.s32.totalorder %s245, 15
      %s247 = scalar_select %p246, %s245, 15
      %s248 = smul.addr %s247, 8
      %s249 = scalar_lea.vmem %s5, %s248
      %p250 = pneg %p148
      %p251 = pneg %p145
      %p252 = pneg %p174
      %p253 = pneg %p171
      %s254 = smul.u32 8, %s17
      %p255 = scmp.lt.s32.totalorder %s254, 15
      %s256 = scalar_select %p255, %s254, 15
      %s257 = smul.addr %s256, 8
      %s258 = scalar_lea.vmem %s6, %s257
      %s259 = smul.u32 8, %s17
      %p260 = scmp.lt.s32.totalorder %s259, 15
      %s261 = scalar_select %p260, %s259, 15
      %s262 = smul.addr %s261, 4
      %s263 = scalar_lea.vmem %s0, %s262
      %s264 = smul.u32 8, %s17
      %s265 = smul.u32 8, %s17
      %p266 = scmp.lt.s32.totalorder %s265, 15
      %s267 = scalar_select %p266, %s265, 15
      %s268 = smul.addr %s267, 8
      %s269 = scalar_lea.vmem %s5, %s268
      %s270 = smul.u32 8, %s17
      %s271 = smul.u32 8, %s17
      %p272 = scmp.lt.s32.totalorder %s271, 15
      %s273 = scalar_select %p272, %s271, 15
      %s274 = smul.addr %s273, 8
      %s275 = scalar_lea.vmem %s6, %s274
      %s276 = smul.u32 8, %s17
      %v278 = vld [vmem:[%s263] sm:$0xf]
      %v279 = vld [vmem:[%s263 + $0x4] sm:$0xf]
      %v280 = vld [vmem:[%s263 + $0x8] sm:$0xf]
      %v281 = vld [vmem:[%s263 + $0xc] sm:$0xf]
      %v282 = vld [vmem:[%s263 + $0x10] sm:$0xf]
      %v283 = vld [vmem:[%s263 + $0x14] sm:$0xf]
      %v284 = vld [vmem:[%s263 + $0x18] sm:$0xf]
      %v285 = vld [vmem:[%s263 + $0x1c] sm:$0xf]
      %v286 = vld [vmem:[%s1] sm:$0xf]
      %v287 = vld [vmem:[%s1 + $0x4] sm:$0xf]
      %v288 = vld [vmem:[%s1 + $0x8] sm:$0xf]
      %v289 = vld [vmem:[%s1 + $0xc] sm:$0xf]
      %v290 = vld [vmem:[%s2] sm:$0x1]
      %v292 = vperm.slane %v290, 0
      %v302 = vunpack.c.l.b16 %v278
      %v303 = vunpack.c.l.b16 %v279
      %v304 = vunpack.c.l.b16 %v280
      %v305 = vunpack.c.l.b16 %v281
      %v306 = vunpack.c.l.b16 %v282
      %v307 = vunpack.c.l.b16 %v283
      %v308 = vunpack.c.l.b16 %v284
      %v309 = vunpack.c.l.b16 %v285
      %v310 = vpack.c.b16 %v303, %v302
      %v311 = vpack.c.b16 %v305, %v304
      %v312 = vpack.c.b16 %v307, %v306
      %v313 = vpack.c.b16 %v309, %v308
      %v318 = vunpack.c.l.b16 %v286
      %v319 = vunpack.c.l.b16 %v287
      %v320 = vunpack.c.l.b16 %v288
      %v321 = vunpack.c.l.b16 %v289
      %v322 = vpack.c.b16 %v319, %v318
      %v323 = vpack.c.b16 %v321, %v320
      %vm326 = vcmask 261120
      %v328 = vsel %vm326, %v310, 0
      %v331 = vsel %vm326, %v311, 0
      %v334 = vsel %vm326, %v312, 0
      %v337 = vsel %vm326, %v313, 0
      %339 = vmatpush.bf16.msra.mxu0 0
      %340 = vmatpush.bf16.msra.mxu0 0
      %341 = vmatpush.bf16.msra.mxu0 0
      %342 = vmatpush.bf16.msra.mxu0 0
      %343 = vmatpush.bf16.msra.mxu0 0
      %344 = vmatpush.bf16.msra.mxu0 0
      %345 = vmatpush.bf16.msra.mxu0 %v323
      %346 = vmatpush.bf16.msra.mxu0 %v322
      %347 = vmatmul.bf16.gmra.mxu0 %v328
      %v348 = vpop.f32.mrf.mxu0
      %v349 = vadd.f32 %v292, %v348
      %v350 = vpop.f32.mrf.mxu0
      %v351 = vadd.f32 %v292, %v350
      %352 = vmatmul.bf16.gmra.mxu0 %v331
      %v353 = vpop.f32.mrf.mxu0
      %v354 = vadd.f32 %v292, %v353
      %v355 = vpop.f32.mrf.mxu0
      %v356 = vadd.f32 %v292, %v355
      %357 = vmatmul.bf16.gmra.mxu0 %v334
      %v358 = vpop.f32.mrf.mxu0
      %v359 = vadd.f32 %v292, %v358
      %v360 = vpop.f32.mrf.mxu0
      %v361 = vadd.f32 %v292, %v360
      %362 = vmatmul.bf16.gmra.mxu0 %v337
      %v363 = vpop.f32.mrf.mxu0
      %v364 = vadd.f32 %v292, %v363
      %v365 = vpop.f32.mrf.mxu0
      %v366 = vadd.f32 %v292, %v365
      %367 = vdwg.mxu0
      %v368 = vld [vmem:[%s269] sm:$0xff]
      %v369 = vld [vmem:[%s269 + $0x8] sm:$0xff]
      %v370 = vld [vmem:[%s269 + $0x10] sm:$0xff]
      %v371 = vld [vmem:[%s269 + $0x18] sm:$0xff]
      %v372 = vld [vmem:[%s269 + $0x20] sm:$0xff]
      %v373 = vld [vmem:[%s269 + $0x28] sm:$0xff]
      %v374 = vld [vmem:[%s269 + $0x30] sm:$0xff]
      %v375 = vld [vmem:[%s269 + $0x38] sm:$0xff]
      %377 = vset.pattern.permute.xlu0 0
      %378 = vperm.xlu0 %377, %v368
      %v379 = vpop.permute.xlu0 %378
      %382 = vset.pattern.permute.xlu0 0
      %383 = vperm.xlu0 %382, %v369
      %v384 = vpop.permute.xlu0 %383
      %387 = vset.pattern.permute.xlu0 0
      %388 = vperm.xlu0 %387, %v370
      %v389 = vpop.permute.xlu0 %388
      %392 = vset.pattern.permute.xlu0 0
      %393 = vperm.xlu0 %392, %v371
      %v394 = vpop.permute.xlu0 %393
      %397 = vset.pattern.permute.xlu0 0
      %398 = vperm.xlu0 %397, %v372
      %v399 = vpop.permute.xlu0 %398
      %402 = vset.pattern.permute.xlu0 0
      %403 = vperm.xlu0 %402, %v373
      %v404 = vpop.permute.xlu0 %403
      %407 = vset.pattern.permute.xlu0 0
      %408 = vperm.xlu0 %407, %v374
      %v409 = vpop.permute.xlu0 %408
      %412 = vset.pattern.permute.xlu0 0
      %413 = vperm.xlu0 %412, %v375
      %v414 = vpop.permute.xlu0 %413
      %v416 = vmul.f32 %v349, %v379
      %v417 = vmul.f32 %v351, %v384
      %v418 = vmul.f32 %v354, %v389
      %v419 = vmul.f32 %v356, %v394
      %v420 = vmul.f32 %v359, %v399
      %v421 = vmul.f32 %v361, %v404
      %v422 = vmul.f32 %v364, %v409
      %v423 = vmul.f32 %v366, %v414
      %432 = vrot.lane.b32.xlu0 %v349, 96
      %v433 = vpop.permute.xlu0 %432
      %434 = vrot.lane.b32.xlu0 %v351, 96
      %v435 = vpop.permute.xlu0 %434
      %436 = vrot.lane.b32.xlu0 %v354, 96
      %v437 = vpop.permute.xlu0 %436
      %438 = vrot.lane.b32.xlu0 %v356, 96
      %v439 = vpop.permute.xlu0 %438
      %440 = vrot.lane.b32.xlu0 %v359, 96
      %v441 = vpop.permute.xlu0 %440
      %442 = vrot.lane.b32.xlu0 %v361, 96
      %v443 = vpop.permute.xlu0 %442
      %444 = vrot.lane.b32.xlu0 %v364, 96
      %v445 = vpop.permute.xlu0 %444
      %446 = vrot.lane.b32.xlu0 %v366, 96
      %v447 = vpop.permute.xlu0 %446
      %v456 = vrot.slane %v433, 1
      %v457 = vrot.slane %v435, 1
      %v458 = vrot.slane %v437, 1
      %v459 = vrot.slane %v439, 1
      %v460 = vrot.slane %v441, 1
      %v461 = vrot.slane %v443, 1
      %v462 = vrot.slane %v445, 1
      %v463 = vrot.slane %v447, 1
      %v464 = vlaneseq
      %v465 = vshrl.u32 %v464, 7
      %vm466 = vcmp.lt.s32.totalorder %v465, 7
      %v467 = vsel %vm466, %v462, %v463
      %v468 = vsel %vm466, %v461, %v462
      %v469 = vsel %vm466, %v460, %v461
      %v470 = vsel %vm466, %v459, %v460
      %v471 = vsel %vm466, %v458, %v459
      %v472 = vsel %vm466, %v457, %v458
      %v473 = vsel %vm466, %v456, %v457
      %v474 = vsel %vm466, %v463, %v456
      %475 = vset.pattern.permute.xlu0 1
      %476 = vperm.xlu0 %475, %v368
      %v477 = vpop.permute.xlu0 %476
      %479 = vset.pattern.permute.xlu0 1
      %480 = vperm.xlu0 %479, %v369
      %v481 = vpop.permute.xlu0 %480
      %483 = vset.pattern.permute.xlu0 1
      %484 = vperm.xlu0 %483, %v370
      %v485 = vpop.permute.xlu0 %484
      %487 = vset.pattern.permute.xlu0 1
      %488 = vperm.xlu0 %487, %v371
      %v489 = vpop.permute.xlu0 %488
      %491 = vset.pattern.permute.xlu0 1
      %492 = vperm.xlu0 %491, %v372
      %v493 = vpop.permute.xlu0 %492
      %495 = vset.pattern.permute.xlu0 1
      %496 = vperm.xlu0 %495, %v373
      %v497 = vpop.permute.xlu0 %496
      %499 = vset.pattern.permute.xlu0 1
      %500 = vperm.xlu0 %499, %v374
      %v501 = vpop.permute.xlu0 %500
      %503 = vset.pattern.permute.xlu0 1
      %504 = vperm.xlu0 %503, %v375
      %v505 = vpop.permute.xlu0 %504
      %v507 = vmul.f32 %v473, %v477
      %v508 = vmul.f32 %v472, %v481
      %v509 = vmul.f32 %v471, %v485
      %v510 = vmul.f32 %v470, %v489
      %v511 = vmul.f32 %v469, %v493
      %v512 = vmul.f32 %v468, %v497
      %v513 = vmul.f32 %v467, %v501
      %v514 = vmul.f32 %v474, %v505
      %v515 = vadd.f32 %v416, %v507
      %v516 = vadd.f32 %v417, %v508
      %v517 = vadd.f32 %v418, %v509
      %v518 = vadd.f32 %v419, %v510
      %v519 = vadd.f32 %v420, %v511
      %v520 = vadd.f32 %v421, %v512
      %v521 = vadd.f32 %v422, %v513
      %v522 = vadd.f32 %v423, %v514
      %523 = vrot.lane.b32.xlu0 %v349, 64
      %v524 = vpop.permute.xlu0 %523
      %525 = vrot.lane.b32.xlu0 %v351, 64
      %v526 = vpop.permute.xlu0 %525
      %527 = vrot.lane.b32.xlu0 %v354, 64
      %v528 = vpop.permute.xlu0 %527
      %529 = vrot.lane.b32.xlu0 %v356, 64
      %v530 = vpop.permute.xlu0 %529
      %531 = vrot.lane.b32.xlu0 %v359, 64
      %v532 = vpop.permute.xlu0 %531
      %533 = vrot.lane.b32.xlu0 %v361, 64
      %v534 = vpop.permute.xlu0 %533
      %535 = vrot.lane.b32.xlu0 %v364, 64
      %v536 = vpop.permute.xlu0 %535
      %537 = vrot.lane.b32.xlu0 %v366, 64
      %v538 = vpop.permute.xlu0 %537
      %v547 = vrot.slane %v524, 2
      %v548 = vrot.slane %v526, 2
      %v549 = vrot.slane %v528, 2
      %v550 = vrot.slane %v530, 2
      %v551 = vrot.slane %v532, 2
      %v552 = vrot.slane %v534, 2
      %v553 = vrot.slane %v536, 2
      %v554 = vrot.slane %v538, 2
      %vm555 = vcmp.lt.s32.totalorder %v465, 6
      %v556 = vsel %vm555, %v553, %v554
      %v557 = vsel %vm555, %v552, %v553
      %v558 = vsel %vm555, %v551, %v552
      %v559 = vsel %vm555, %v550, %v551
      %v560 = vsel %vm555, %v549, %v550
      %v561 = vsel %vm555, %v548, %v549
      %v562 = vsel %vm555, %v547, %v548
      %v563 = vsel %vm555, %v554, %v547
      %564 = vset.pattern.permute.xlu0 2
      %565 = vperm.xlu0 %564, %v368
      %v566 = vpop.permute.xlu0 %565
      %568 = vset.pattern.permute.xlu0 2
      %569 = vperm.xlu0 %568, %v369
      %v570 = vpop.permute.xlu0 %569
      %572 = vset.pattern.permute.xlu0 2
      %573 = vperm.xlu0 %572, %v370
      %v574 = vpop.permute.xlu0 %573
      %576 = vset.pattern.permute.xlu0 2
      %577 = vperm.xlu0 %576, %v371
      %v578 = vpop.permute.xlu0 %577
      %580 = vset.pattern.permute.xlu0 2
      %581 = vperm.xlu0 %580, %v372
      %v582 = vpop.permute.xlu0 %581
      %584 = vset.pattern.permute.xlu0 2
      %585 = vperm.xlu0 %584, %v373
      %v586 = vpop.permute.xlu0 %585
      %588 = vset.pattern.permute.xlu0 2
      %589 = vperm.xlu0 %588, %v374
      %v590 = vpop.permute.xlu0 %589
      %592 = vset.pattern.permute.xlu0 2
      %593 = vperm.xlu0 %592, %v375
      %v594 = vpop.permute.xlu0 %593
      %v596 = vmul.f32 %v562, %v566
      %v597 = vmul.f32 %v561, %v570
      %v598 = vmul.f32 %v560, %v574
      %v599 = vmul.f32 %v559, %v578
      %v600 = vmul.f32 %v558, %v582
      %v601 = vmul.f32 %v557, %v586
      %v602 = vmul.f32 %v556, %v590
      %v603 = vmul.f32 %v563, %v594
      %v604 = vadd.f32 %v515, %v596
      %v605 = vadd.f32 %v516, %v597
      %v606 = vadd.f32 %v517, %v598
      %v607 = vadd.f32 %v518, %v599
      %v608 = vadd.f32 %v519, %v600
      %v609 = vadd.f32 %v520, %v601
      %v610 = vadd.f32 %v521, %v602
      %v611 = vadd.f32 %v522, %v603
      %vm612 = vcmp.gt.f32.partialorder %v604, 0.0
      %vm613 = vcmp.gt.f32.partialorder %v605, 0.0
      %vm614 = vcmp.gt.f32.partialorder %v606, 0.0
      %vm615 = vcmp.gt.f32.partialorder %v607, 0.0
      %vm616 = vcmp.gt.f32.partialorder %v608, 0.0
      %vm617 = vcmp.gt.f32.partialorder %v609, 0.0
      %vm618 = vcmp.gt.f32.partialorder %v610, 0.0
      %vm619 = vcmp.gt.f32.partialorder %v611, 0.0
      %v620 = vmul.f32 %v604, 1.442695
      %v621 = vpow.pop %v620
      %v622 = vmul.f32 %v605, 1.442695
      %v623 = vpow.pop %v622
      %v624 = vmul.f32 %v606, 1.442695
      %v625 = vpow.pop %v624
      %v626 = vmul.f32 %v607, 1.442695
      %v627 = vpow.pop %v626
      %v628 = vmul.f32 %v608, 1.442695
      %v629 = vpow.pop %v628
      %v630 = vmul.f32 %v609, 1.442695
      %v631 = vpow.pop %v630
      %v632 = vmul.f32 %v610, 1.442695
      %v633 = vpow.pop %v632
      %v634 = vmul.f32 %v611, 1.442695
      %v635 = vpow.pop %v634
      %v636 = vsub.f32 %v621, 1.0
      %v637 = vsub.f32 %v623, 1.0
      %v638 = vsub.f32 %v625, 1.0
      %v639 = vsub.f32 %v627, 1.0
      %v640 = vsub.f32 %v629, 1.0
      %v641 = vsub.f32 %v631, 1.0
      %v642 = vsub.f32 %v633, 1.0
      %v643 = vsub.f32 %v635, 1.0
      %v644 = vsel %vm612, %v604, %v636
      %v645 = vsel %vm613, %v605, %v637
      %v646 = vsel %vm614, %v606, %v638
      %v647 = vsel %vm615, %v607, %v639
      %v648 = vsel %vm616, %v608, %v640
      %v649 = vsel %vm617, %v609, %v641
      %v650 = vsel %vm618, %v610, %v642
      %v651 = vsel %vm619, %v611, %v643
      %v652 = vpack.c.bf16 %v645, %v644
      %v653 = vpack.c.bf16 %v647, %v646
      %v654 = vpack.c.bf16 %v649, %v648
      %v655 = vpack.c.bf16 %v651, %v650
      %v656 = vld [vmem:[%s3] sm:$0xf]
      %v657 = vld [vmem:[%s3 + $0x4] sm:$0xf]
      %v658 = vld [vmem:[%s3 + $0x8] sm:$0xf]
      %v659 = vld [vmem:[%s3 + $0xc] sm:$0xf]
      %v660 = vld [vmem:[%s4] sm:$0x1]
      %v662 = vperm.slane %v660, 0
      %v668 = vunpack.c.l.b16 %v656
      %v669 = vunpack.c.l.b16 %v657
      %v670 = vunpack.c.l.b16 %v658
      %v671 = vunpack.c.l.b16 %v659
      %v672 = vpack.c.b16 %v669, %v668
      %v673 = vpack.c.b16 %v671, %v670
      %v677 = vsel %vm326, %v652, 0
      %v680 = vsel %vm326, %v653, 0
      %v683 = vsel %vm326, %v654, 0
      %v686 = vsel %vm326, %v655, 0
      %688 = vmatpush.bf16.msra.mxu0 0
      %689 = vmatpush.bf16.msra.mxu0 0
      %690 = vmatpush.bf16.msra.mxu0 0
      %691 = vmatpush.bf16.msra.mxu0 0
      %692 = vmatpush.bf16.msra.mxu0 0
      %693 = vmatpush.bf16.msra.mxu0 0
      %694 = vmatpush.bf16.msra.mxu0 %v673
      %695 = vmatpush.bf16.msra.mxu0 %v672
      %696 = vmatmul.bf16.gmra.mxu0 %v677
      %v697 = vpop.f32.mrf.mxu0
      %v698 = vadd.f32 %v662, %v697
      %v699 = vpop.f32.mrf.mxu0
      %v700 = vadd.f32 %v662, %v699
      %701 = vmatmul.bf16.gmra.mxu0 %v680
      %v702 = vpop.f32.mrf.mxu0
      %v703 = vadd.f32 %v662, %v702
      %v704 = vpop.f32.mrf.mxu0
      %v705 = vadd.f32 %v662, %v704
      %706 = vmatmul.bf16.gmra.mxu0 %v683
      %v707 = vpop.f32.mrf.mxu0
      %v708 = vadd.f32 %v662, %v707
      %v709 = vpop.f32.mrf.mxu0
      %v710 = vadd.f32 %v662, %v709
      %711 = vmatmul.bf16.gmra.mxu0 %v686
      %v712 = vpop.f32.mrf.mxu0
      %v713 = vadd.f32 %v662, %v712
      %v714 = vpop.f32.mrf.mxu0
      %v715 = vadd.f32 %v662, %v714
      %716 = vdwg.mxu0
      %717 = vst.msk [vmem:[%s275] sm:$0xff] %vm326, %v698
      %718 = vst.msk [vmem:[%s275 + $0x8] sm:$0xff] %vm326, %v700
      %719 = vst.msk [vmem:[%s275 + $0x10] sm:$0xff] %vm326, %v703
      %720 = vst.msk [vmem:[%s275 + $0x18] sm:$0xff] %vm326, %v705
      %721 = vst.msk [vmem:[%s275 + $0x20] sm:$0xff] %vm326, %v708
      %722 = vst.msk [vmem:[%s275 + $0x28] sm:$0xff] %vm326, %v710
      %723 = vst.msk [vmem:[%s275 + $0x30] sm:$0xff] %vm326, %v713
      %724 = vst.msk [vmem:[%s275 + $0x38] sm:$0xff] %vm326, %v715
      %s725 = smul.u32 8, %s17
      %p726 = scmp.lt.s32.totalorder %s725, 15
      %s727 = scalar_select %p726, %s725, 15
      %s728 = smul.addr %s727, 8
      %s729 = scalar_lea.vmem %s6, %s728
      // Predicated region
      $region45: #{tpu_custom_call.1} parent=43 // pred_check
        %p730 = pneg %p171
      $region46: #{tpu_custom_call.1} parent=43 // pred_check_branch
        %732 = sbr.rel (%p730) target = $region48
      $region47: #{tpu_custom_call.1} parent=43 // pred_region
        %s733 = smul.u32 8, %s17
      $region48: #{tpu_custom_call.1} parent=43 // pred_fallthru
        _
    $region44: #{tpu_custom_call.1} parent=5 // pred_fallthru
      _
    %p734 = scmp.le.s32.totalorder 2, %s12
    // Predicated region
    $region49: #{tpu_custom_call.1} parent=5 // pred_check
      %p735 = pneg %p734
    $region50: #{tpu_custom_call.1} parent=5 // pred_check_branch
      %737 = sbr.rel (%p735) target = $region52
    $region51: #{tpu_custom_call.1} parent=5 // pred_region
      %s738 = ssub.s32 %s12, 2
      // Predicated region
      $region53: #{tpu_custom_call.1} parent=51 // pred_check
        %p739 = pneg %p177
      $region54: #{tpu_custom_call.1} parent=51 // pred_check_branch
        %741 = sbr.rel (%p739) target = $region56
      $region55: #{tpu_custom_call.1} parent=51 // pred_region
        %s742 = smul.u32 8, %s18
        %p743 = scmp.lt.s32.totalorder %s742, 15
        %s744 = scalar_select %p743, %s742, 15
        %s745 = smul.addr %s744, 8
        %s746 = scalar_lea.vmem %s6, %s745
      $region56: #{tpu_custom_call.1} parent=51 // pred_fallthru
        _
    $region52: #{tpu_custom_call.1} parent=5 // pred_fallthru
      _
  $region6: #{tpu_custom_call.1} parent=0 // loop_footer
    %s16 = sadd.s32 1, %s12
  $region7: #{tpu_custom_call.1} parent=0 // loop_footer_branch
    %11 = sbr.rel target = $region3
  $region8: #{tpu_custom_call.1} parent=0 // loop_exit
    _

</llo_original>
